<compile_context>
chip_gen: v5e
topology: v5e:2x2
jax: 0.10.0
libtpu: 0.0.40
codegen_flags: <defaults>
</compile_context>

<pallas_src>
import functools

import jax
import jax.numpy as jnp
from jax.experimental import pallas as pl
from jax.experimental.pallas import tpu as pltpu


WEIGHT_PAD = 128  # lane-dense width for the [B, 2] attention-weight output


def _round_up(x, m):
    return (x + m - 1) // m * m


def output_attention_kernel(h_ref, sf_ref, cf_ref,
                            wv_ref, bv_ref, wh_ref, bh_ref, wa_ref, ba_ref,
                            out_ref, weight_ref):
    f32 = jnp.float32
    h = h_ref[...]                       # [TB, R] f32
    sf = sf_ref[...]                     # [TB, R] f32
    cf = cf_ref[...]                     # [TB, R] f32

    mm_dtype = wv_ref.dtype              # matmul operand dtype (f32 or bf16)
    wv = wv_ref[...]                     # [R, A]
    wh = wh_ref[...]                     # [R, A]
    bv = bv_ref[...].astype(f32)         # [1, A]
    bh = bh_ref[...].astype(f32)         # [1, A]
    wa = wa_ref[...].astype(f32)         # [1, A]
    ba = ba_ref[0, 0]                    # scalar bias of wa (SMEM -> sreg)

    tb = h.shape[0]

    # wh(h): one MXU matmul, f32 accumulation.
    hv = jnp.dot(h.astype(mm_dtype), wh, preferred_element_type=f32) + bh   # [TB, A]

    # Fused wv(feats): single weight-stationary matmul over the stacked branches.
    feats2 = jnp.concatenate([sf, cf], axis=0)                              # [2TB, R]
    fv = jnp.dot(feats2.astype(mm_dtype), wv, preferred_element_type=f32) + bv  # [2TB, A]

    # wa(tanh(wh(h) + wv(feats))): one tanh (EUP) + one lane reduction (XLU)
    # for both sequence positions at once.
    t = jnp.tanh(jnp.concatenate([hv, hv], axis=0) + fv)                    # [2TB, A]
    scores = jnp.sum(t * wa, axis=-1, keepdims=True) + ba                   # [2TB, 1]
    es = scores[:tb]                     # score for single_feat  [TB, 1]
    ec = scores[tb:]                     # score for comp_feat    [TB, 1]

    # Numerically-stable 2-way softmax over the (single, comp) axis.
    m = jnp.maximum(es, ec)
    ps = jnp.exp(es - m)
    pc = jnp.exp(ec - m)
    inv = 1.0 / (ps + pc)
    ws = ps * inv                        # weight on single_feat  [TB, 1]
    wc = pc * inv                        # weight on comp_feat    [TB, 1]

    # bmm(weight.unsqueeze(1), feats).squeeze(1) == ws*single + wc*comp, in f32.
    out_ref[...] = ws * sf + wc * cf

    # Lane-dense weight tile: column 0 = w_single, column 1 = w_comp, rest 0.
    lane = jax.lax.broadcasted_iota(jnp.int32, weight_ref.shape, 1)
    weight_ref[...] = jnp.where(lane == 0, ws, jnp.where(lane == 1, wc, 0.0))


@functools.partial(jax.jit, static_argnames=("max_batch_tile", "matmul_dtype"))
def output_attention(h, single_feat, comp_feat, params, *,
                     max_batch_tile=256, matmul_dtype=jnp.float32):
    """Fused OutputAttention forward. Returns (output_feat [B,R], weight [B,2])."""
    f32 = jnp.float32
    B, R = h.shape
    A = params["wv"].shape[1]

    # Batch tile: multiple of 8 sublanes, capped so weights + double-buffered
    # activation tiles stay well under the VMEM budget on every generation.
    TB = min(max_batch_tile, _round_up(B, 8))
    Bp = _round_up(B, TB)
    grid = (Bp // TB,)

    def pad_b(x):
        x = x.astype(f32)
        return x if Bp == B else jnp.pad(x, ((0, Bp - B), (0, 0)))

    hp = pad_b(h)
    sfp = pad_b(single_feat)
    cfp = pad_b(comp_feat)

    wv = params["wv"].astype(matmul_dtype)
    wh = params["wh"].astype(matmul_dtype)
    bv = params["bv"].astype(f32)
    bh = params["bh"].astype(f32)
    wa = params["wa"].astype(f32)
    ba = params["ba"].astype(f32)        # (1, 1) scalar -> SMEM

    act_spec = pl.BlockSpec((TB, R), lambda i: (i, 0))

    def resident(shape):                 # weights: DMA'd once, VMEM-resident
        return pl.BlockSpec(shape, lambda i: (0, 0))

    in_specs = [
        act_spec, act_spec, act_spec,                          # h, single, comp
        resident((R, A)),                                      # wv
        resident((1, A)),                                      # bv
        resident((R, A)),                                      # wh
        resident((1, A)),                                      # bh
        resident((1, A)),                                      # wa
        pl.BlockSpec(memory_space=pltpu.MemorySpace.SMEM),     # ba (scalar)
    ]
    out_specs = (
        pl.BlockSpec((TB, R), lambda i: (i, 0)),               # output_feat
        pl.BlockSpec((TB, WEIGHT_PAD), lambda i: (i, 0)),      # lane-dense weights
    )
    out_shape = (jax.ShapeDtypeStruct((Bp, R), f32),
                 jax.ShapeDtypeStruct((Bp, WEIGHT_PAD), f32))

    itemsize = jnp.dtype(matmul_dtype).itemsize
    cost = pl.CostEstimate(
        flops=int(2 * Bp * R * A * 3 + 10 * Bp * A),
        transcendentals=int(2 * Bp * A + 2 * Bp),
        bytes_accessed=int(4 * (4 * Bp * R + Bp * WEIGHT_PAD + 3 * A + 1)
                           + itemsize * 2 * R * A),
    )

    out_p, w_p = pl.pallas_call(
        output_attention_kernel,
        grid=grid,
        out_shape=out_shape,
        in_specs=in_specs,
        out_specs=out_specs,
        compiler_params=pltpu.CompilerParams(
            dimension_semantics=("parallel",)),
        cost_estimate=cost,
    )(hp, sfp, cfp, wv, bv, wh, bh, wa, ba)

    return out_p[:B], w_p[:B, :2]


def init_params(key, rnn_size, att_hid_size):
    """Deterministic synthetic params. Linear weights stored as [in, out]."""
    ks = jax.random.split(key, 6)
    sv = 1.0 / jnp.sqrt(rnn_size)
    sa = 1.0 / jnp.sqrt(att_hid_size)
    return {
        "wv": jax.random.uniform(ks[0], (rnn_size, att_hid_size), jnp.float32, -sv, sv),
        "bv": jax.random.uniform(ks[1], (1, att_hid_size), jnp.float32, -sv, sv),
        "wh": jax.random.uniform(ks[2], (rnn_size, att_hid_size), jnp.float32, -sv, sv),
        "bh": jax.random.uniform(ks[3], (1, att_hid_size), jnp.float32, -sv, sv),
        "wa": jax.random.uniform(ks[4], (1, att_hid_size), jnp.float32, -sa, sa),
        "ba": jax.random.uniform(ks[5], (1, 1), jnp.float32, -sa, sa),
    }


def reference(h, single_feat, comp_feat, p):
    """Plain-JAX transcription of the PyTorch forward (sanity check)."""
    feats = jnp.stack([single_feat, comp_feat], axis=1)                 # [B,2,R]
    feats_ = feats @ p["wv"] + p["bv"][0]                               # [B,2,A]
    dot = (h @ p["wh"] + p["bh"][0])[:, None, :] + feats_               # [B,2,A]
    scores = jnp.tanh(dot) @ p["wa"][0] + p["ba"][0, 0]                 # [B,2]
    weight = jax.nn.softmax(scores, axis=1)                             # [B,2]
    out = jnp.einsum("bk,bkr->br", weight, feats)                       # [B,R]
    return out, weight


if __name__ == "__main__":
    B = 8            # batch
    RNN_SIZE = 128   # opt.rnn_size
    ATT_HID = 128    # opt.att_hid_size

    key = jax.random.PRNGKey(0)
    k_h, k_s, k_c, k_p = jax.random.split(key, 4)
    h = jax.random.normal(k_h, (B, RNN_SIZE), jnp.float32)
    single_feat = jax.random.normal(k_s, (B, RNN_SIZE), jnp.float32)
    comp_feat = jax.random.normal(k_c, (B, RNN_SIZE), jnp.float32)
    params = init_params(k_p, RNN_SIZE, ATT_HID)

    ref_out, ref_w = reference(h, single_feat, comp_feat, params)

    # Exact (f32 matmul) path — matches the PyTorch/f32 reference tightly.
    out_feat, weight = output_attention(h, single_feat, comp_feat, params)
    jax.block_until_ready((out_feat, weight))
    assert out_feat.shape == (B, RNN_SIZE) and weight.shape == (B, 2)
    assert jnp.allclose(out_feat, ref_out, atol=1e-5, rtol=1e-5)
    assert jnp.allclose(weight, ref_w, atol=1e-5, rtol=1e-5)

    # bf16 matmul-operand path (the v6e/v7x production choice) — looser tolerance.
    out_bf, w_bf = output_attention(h, single_feat, comp_feat, params,
                                    matmul_dtype=jnp.bfloat16)
    jax.block_until_ready((out_bf, w_bf))
    assert jnp.allclose(out_bf, ref_out, atol=3e-2, rtol=3e-2)
    assert jnp.allclose(w_bf, ref_w, atol=3e-2, rtol=3e-2)

    print("KERNEL_OK")
</pallas_src>

<mosaic_0001>
module attributes {stable_mosaic.version = 11 : i64} {
  func.func @output_attention_kernel(%arg0: i32, %arg1: memref<8x128xf32, #tpu.memory_space<vmem>>, %arg2: memref<8x128xf32, #tpu.memory_space<vmem>>, %arg3: memref<8x128xf32, #tpu.memory_space<vmem>>, %arg4: memref<128x128xf32, #tpu.memory_space<vmem>>, %arg5: memref<1x128xf32, #tpu.memory_space<vmem>>, %arg6: memref<128x128xf32, #tpu.memory_space<vmem>>, %arg7: memref<1x128xf32, #tpu.memory_space<vmem>>, %arg8: memref<1x128xf32, #tpu.memory_space<vmem>>, %arg9: memref<1x1xf32, #tpu.memory_space<smem>>, %arg10: memref<8x128xf32, #tpu.memory_space<vmem>>, %arg11: memref<8x128xf32, #tpu.memory_space<vmem>>) attributes {dimension_semantics = [#tpu.dimension_semantics<parallel>], iteration_bounds = array<i64: 1>, scalar_prefetch = 0 : i64, scratch_operands = 0 : i64, tpu.core_type = #tpu.core_type<tc>, window_params = [{transform_indices = @transform_0, window_bounds = array<i64: 8, 128>}, {transform_indices = @transform_1, window_bounds = array<i64: 8, 128>}, {transform_indices = @transform_2, window_bounds = array<i64: 8, 128>}, {pipeline_mode = #tpu.pipeline_mode<synchronous>, transform_indices = @transform_3, window_bounds = array<i64: 128, 128>}, {pipeline_mode = #tpu.pipeline_mode<synchronous>, transform_indices = @transform_4, window_bounds = array<i64: 1, 128>}, {pipeline_mode = #tpu.pipeline_mode<synchronous>, transform_indices = @transform_5, window_bounds = array<i64: 128, 128>}, {pipeline_mode = #tpu.pipeline_mode<synchronous>, transform_indices = @transform_6, window_bounds = array<i64: 1, 128>}, {pipeline_mode = #tpu.pipeline_mode<synchronous>, transform_indices = @transform_7, window_bounds = array<i64: 1, 128>}, {transform_indices = @transform_8, window_bounds = array<i64: 1, 1>}, {transform_indices = @transform_9, window_bounds = array<i64: 8, 128>}, {transform_indices = @transform_10, window_bounds = array<i64: 8, 128>}]} {
    %c0 = arith.constant 0 : index
    %c0_0 = arith.constant 0 : index
    %0 = vector.load %arg1[%c0, %c0_0] : memref<8x128xf32, #tpu.memory_space<vmem>>, vector<8x128xf32>
    %c0_1 = arith.constant 0 : index
    %c0_2 = arith.constant 0 : index
    %1 = vector.load %arg2[%c0_1, %c0_2] : memref<8x128xf32, #tpu.memory_space<vmem>>, vector<8x128xf32>
    %c0_3 = arith.constant 0 : index
    %c0_4 = arith.constant 0 : index
    %2 = vector.load %arg3[%c0_3, %c0_4] : memref<8x128xf32, #tpu.memory_space<vmem>>, vector<8x128xf32>
    %c0_5 = arith.constant 0 : index
    %c0_6 = arith.constant 0 : index
    %3 = vector.load %arg4[%c0_5, %c0_6] : memref<128x128xf32, #tpu.memory_space<vmem>>, vector<128x128xf32>
    %c0_7 = arith.constant 0 : index
    %c0_8 = arith.constant 0 : index
    %4 = vector.load %arg6[%c0_7, %c0_8] : memref<128x128xf32, #tpu.memory_space<vmem>>, vector<128x128xf32>
    %c0_9 = arith.constant 0 : index
    %c0_10 = arith.constant 0 : index
    %5 = vector.load %arg5[%c0_9, %c0_10] : memref<1x128xf32, #tpu.memory_space<vmem>>, vector<1x128xf32>
    %c0_11 = arith.constant 0 : index
    %c0_12 = arith.constant 0 : index
    %6 = vector.load %arg7[%c0_11, %c0_12] : memref<1x128xf32, #tpu.memory_space<vmem>>, vector<1x128xf32>
    %c0_13 = arith.constant 0 : index
    %c0_14 = arith.constant 0 : index
    %7 = vector.load %arg8[%c0_13, %c0_14] : memref<1x128xf32, #tpu.memory_space<vmem>>, vector<1x128xf32>
    %c0_15 = arith.constant 0 : index
    %c0_16 = arith.constant 0 : index
    %8 = memref.load %arg9[%c0_15, %c0_16] : memref<1x1xf32, #tpu.memory_space<smem>>
    %cst = arith.constant dense<0.000000e+00> : vector<8x128xf32>
    %9 = tpu.matmul %0, %4, %cst {dimension_numbers = #tpu.dot_dimension_numbers<[1], [0], [0], [1], [0, 0, 1, 1], [], []>} : vector<8x128xf32>, vector<128x128xf32>, vector<8x128xf32> -> vector<8x128xf32>
    %10 = vector.broadcast %6 : vector<1x128xf32> to vector<8x128xf32>
    %11 = arith.addf %9, %10 : vector<8x128xf32>
    %12 = tpu.concatenate %1, %2 in 0 : vector<8x128xf32>, vector<8x128xf32> -> vector<16x128xf32>
    %cst_17 = arith.constant dense<0.000000e+00> : vector<16x128xf32>
    %13 = tpu.matmul %12, %3, %cst_17 {dimension_numbers = #tpu.dot_dimension_numbers<[1], [0], [0], [1], [0, 0, 1, 1], [], []>} : vector<16x128xf32>, vector<128x128xf32>, vector<16x128xf32> -> vector<16x128xf32>
    %14 = vector.broadcast %5 : vector<1x128xf32> to vector<16x128xf32>
    %15 = arith.addf %13, %14 : vector<16x128xf32>
    %16 = tpu.concatenate %11, %11 in 0 : vector<8x128xf32>, vector<8x128xf32> -> vector<16x128xf32>
    %17 = arith.addf %16, %15 : vector<16x128xf32>
    %18 = math.tanh %17 : vector<16x128xf32>
    %19 = vector.broadcast %7 : vector<1x128xf32> to vector<16x128xf32>
    %20 = arith.mulf %18, %19 : vector<16x128xf32>
    %cst_18 = arith.constant dense<0.000000e+00> : vector<16xf32>
    %21 = vector.multi_reduction <add>, %20, %cst_18 [1] : vector<16x128xf32> to vector<16xf32>
    %22 = vector.shape_cast %21 : vector<16xf32> to vector<16x1xf32>
    %23 = vector.broadcast %8 : f32 to vector<16x1xf32>
    %24 = arith.addf %22, %23 : vector<16x1xf32>
    %25 = vector.extract_strided_slice %24 {offsets = [0, 0], sizes = [8, 1], strides = [1, 1]} : vector<16x1xf32> to vector<8x1xf32>
    %26 = vector.extract_strided_slice %24 {offsets = [8, 0], sizes = [8, 1], strides = [1, 1]} : vector<16x1xf32> to vector<8x1xf32>
    %27 = arith.maximumf %25, %26 : vector<8x1xf32>
    %28 = arith.subf %25, %27 : vector<8x1xf32>
    %29 = math.exp %28 : vector<8x1xf32>
    %30 = arith.subf %26, %27 : vector<8x1xf32>
    %31 = math.exp %30 : vector<8x1xf32>
    %32 = arith.addf %29, %31 : vector<8x1xf32>
    %cst_19 = arith.constant 1.000000e+00 : f32
    %33 = vector.broadcast %cst_19 : f32 to vector<8x1xf32>
    %34 = arith.divf %33, %32 : vector<8x1xf32>
    %35 = arith.mulf %29, %34 : vector<8x1xf32>
    %36 = arith.mulf %31, %34 : vector<8x1xf32>
    %37 = vector.broadcast %35 : vector<8x1xf32> to vector<8x128xf32>
    %38 = arith.mulf %37, %1 : vector<8x128xf32>
    %39 = vector.broadcast %36 : vector<8x1xf32> to vector<8x128xf32>
    %40 = arith.mulf %39, %2 : vector<8x128xf32>
    %41 = arith.addf %38, %40 : vector<8x128xf32>
    %c0_20 = arith.constant 0 : index
    %c0_21 = arith.constant 0 : index
    %42 = vector.load %arg10[%c0_20, %c0_21] : memref<8x128xf32, #tpu.memory_space<vmem>>, vector<8x128xf32>
    tpu.vector_store %arg10[%c0_20, %c0_21], %41 {strides = array<i32>} : memref<8x128xf32, #tpu.memory_space<vmem>>, vector<8x128xf32>,
    %43 = tpu.iota {dimensions = array<i32: 1>} : vector<8x128xi32>
    %c0_i32 = arith.constant 0 : i32
    %44 = vector.broadcast %c0_i32 : i32 to vector<8x128xi32>
    %45 = arith.cmpi eq, %43, %44 : vector<8x128xi32>
    %c1_i32 = arith.constant 1 : i32
    %46 = vector.broadcast %c1_i32 : i32 to vector<8x128xi32>
    %47 = arith.cmpi eq, %43, %46 : vector<8x128xi32>
    %cst_22 = arith.constant 0.000000e+00 : f32
    %48 = vector.shape_cast %36 : vector<8x1xf32> to vector<8x1xf32>
    %49 = vector.broadcast %48 : vector<8x1xf32> to vector<8x128xf32>
    %50 = vector.broadcast %cst_22 : f32 to vector<8x128xf32>
    %51 = arith.select %47, %49, %50 : vector<8x128xi1>, vector<8x128xf32>
    %52 = vector.shape_cast %35 : vector<8x1xf32> to vector<8x1xf32>
    %53 = vector.broadcast %52 : vector<8x1xf32> to vector<8x128xf32>
    %54 = arith.select %45, %53, %51 : vector<8x128xi1>, vector<8x128xf32>
    %c0_23 = arith.constant 0 : index
    %c0_24 = arith.constant 0 : index
    %55 = vector.load %arg11[%c0_23, %c0_24] : memref<8x128xf32, #tpu.memory_space<vmem>>, vector<8x128xf32>
    tpu.vector_store %arg11[%c0_23, %c0_24], %54 {strides = array<i32>} : memref<8x128xf32, #tpu.memory_space<vmem>>, vector<8x128xf32>,
    return
  }
  func.func @transform_0(%arg0: i32) -> (i32, i32) {
    %c0_i32 = arith.constant 0 : i32
    %c0_i32_0 = arith.constant 0 : i32
    return %arg0, %c0_i32 : i32, i32
  }
  func.func @transform_1(%arg0: i32) -> (i32, i32) {
    %c0_i32 = arith.constant 0 : i32
    %c0_i32_0 = arith.constant 0 : i32
    return %arg0, %c0_i32 : i32, i32
  }
  func.func @transform_2(%arg0: i32) -> (i32, i32) {
    %c0_i32 = arith.constant 0 : i32
    %c0_i32_0 = arith.constant 0 : i32
    return %arg0, %c0_i32 : i32, i32
  }
  func.func @transform_3(%arg0: i32) -> (i32, i32) {
    %c0_i32 = arith.constant 0 : i32
    %c0_i32_0 = arith.constant 0 : i32
    %c0_i32_1 = arith.constant 0 : i32
    return %c0_i32, %c0_i32_0 : i32, i32
  }
  func.func @transform_4(%arg0: i32) -> (i32, i32) {
    %c0_i32 = arith.constant 0 : i32
    %c0_i32_0 = arith.constant 0 : i32
    %c0_i32_1 = arith.constant 0 : i32
    return %c0_i32, %c0_i32_0 : i32, i32
  }
  func.func @transform_5(%arg0: i32) -> (i32, i32) {
    %c0_i32 = arith.constant 0 : i32
    %c0_i32_0 = arith.constant 0 : i32
    %c0_i32_1 = arith.constant 0 : i32
    return %c0_i32, %c0_i32_0 : i32, i32
  }
  func.func @transform_6(%arg0: i32) -> (i32, i32) {
    %c0_i32 = arith.constant 0 : i32
    %c0_i32_0 = arith.constant 0 : i32
    %c0_i32_1 = arith.constant 0 : i32
    return %c0_i32, %c0_i32_0 : i32, i32
  }
  func.func @transform_7(%arg0: i32) -> (i32, i32) {
    %c0_i32 = arith.constant 0 : i32
    %c0_i32_0 = arith.constant 0 : i32
    %c0_i32_1 = arith.constant 0 : i32
    return %c0_i32, %c0_i32_0 : i32, i32
  }
  func.func @transform_8(%arg0: i32) -> (i32, i32) {
    %c0_i32 = arith.constant 0 : i32
    %c0_i32_0 = arith.constant 0 : i32
    %c0_i32_1 = arith.constant 0 : i32
    return %c0_i32, %c0_i32_0 : i32, i32
  }
  func.func @transform_9(%arg0: i32) -> (i32, i32) {
    %c0_i32 = arith.constant 0 : i32
    %c0_i32_0 = arith.constant 0 : i32
    return %arg0, %c0_i32 : i32, i32
  }
  func.func @transform_10(%arg0: i32) -> (i32, i32) {
    %c0_i32 = arith.constant 0 : i32
    %c0_i32_0 = arith.constant 0 : i32
    return %arg0, %c0_i32 : i32, i32
  }
}

</mosaic_0001>

<llo_original>
// kernel: output_attention.1
$region0: #{output_attention.1}
  #allocation0 [shape = 'u32[]', space=smem, size = 0x4, offset = 0x4, fixed_abs, tag = 'smem constant byte address 0x4 - core index']
  #allocation1 [shape = 'u32[72,128]{1,0:T(1,128)}', space=vmem, size = 0x9000, scoped, tag = 'internal scratch']
  #allocation2 [shape = 'f32[1,1]{1,0:T(1,128)S(6)}', space=smem, size = 0x200, scoped, tag = 'scoped memory for output_attention.1']
  %s0 = inlined_call_operand.hbm [shape: f32[8,128], index: 0, kind: input, shape index: {}]
  %s1 = inlined_call_operand.hbm [shape: f32[8,128], index: 1, kind: input, shape index: {}]
  %s2 = inlined_call_operand.hbm [shape: f32[8,128], index: 2, kind: input, shape index: {}]
  %s3 = inlined_call_operand.hbm [shape: f32[128,128], index: 3, kind: input, shape index: {}]
  %s4 = inlined_call_operand.vmem [shape: f32[1,128], index: 4, kind: input, shape index: {}]
  %s5 = inlined_call_operand.hbm [shape: f32[128,128], index: 5, kind: input, shape index: {}]
  %s6 = inlined_call_operand.vmem [shape: f32[1,128], index: 6, kind: input, shape index: {}]
  %s7 = inlined_call_operand.vmem [shape: f32[1,128], index: 7, kind: input, shape index: {}]
  %s8 = inlined_call_operand.<no memory space> [shape: f32[1,1], index: 8, kind: input, shape index: {}]
  %s9 = inlined_call_operand.hbm [shape: f32[8,128], index: 9, kind: output, shape index: {0}]
  %s10 = inlined_call_operand.vmem [shape: f32[8,128], index: 10, kind: output, shape index: {1}]
  %11 = xla_tuple %s9, %s10
  %s12 = sld [smem:[#allocation0]]
  $region74: #{output_attention.1} parent=0
    _
  %s14 = ssub.s32 1, %s12
  %s15 = scalar_select 0, %s14, %s12
  %16 = sst [smem:[#allocation2]] %s8
  $region1: #{output_attention.1} parent=0
    #allocation3 [shape = 'u8[4096]{0}', space=vmem, size = 0x1000, scoped, tag = 'input window, operand 0, single buffered']
    #allocation4 [shape = 's32[1]{0}', space=sflag, size = 0x4, scoped, tag = 'scoped memory for output_attention.1']
    #allocation5 [shape = 's32[1]{0}', space=sflag, size = 0x4, scoped, tag = 'scoped memory for output_attention.1']
    #allocation6 [shape = 'u8[4096]{0}', space=vmem, size = 0x1000, scoped, tag = 'input window, operand 1, single buffered']
    #allocation7 [shape = 's32[1]{0}', space=sflag, size = 0x4, scoped, tag = 'scoped memory for output_attention.1']
    #allocation8 [shape = 'u8[4096]{0}', space=vmem, size = 0x1000, scoped, tag = 'input window, operand 2, single buffered']
    #allocation9 [shape = 'u8[65536]{0}', space=vmem, size = 0x10000, scoped, tag = 'input window, operand 3, single buffered']
    #allocation10 [shape = 's32[1]{0}', space=sflag, size = 0x4, scoped, tag = 'scoped memory for output_attention.1']
    #allocation11 [shape = 'u8[65536]{0}', space=vmem, size = 0x10000, scoped, tag = 'input window, operand 5, single buffered']
    #allocation12 [shape = 'u8[4096]{0}', space=vmem, size = 0x1000, scoped, tag = 'output window, operand 0, single buffered']
    %17 = vsyncpa [#allocation4], 0
    %18 = vsyncpa [#allocation7], 0
    %19 = vsyncpa [#allocation10], 0
    %20 = vsyncpa [#allocation5], 0
    // Predicated region
    $region2: #{output_attention.1} parent=1 // pred_check
      _
    $region3: #{output_attention.1} parent=1 // pred_check_branch
      %22 = sbr.rel (0) target = $region5
    $region4: #{output_attention.1} parent=1 // pred_region
      %24 = vsyncadd [#allocation4], 0
      %s26 = sshll.u32 %s0, 4
      %s27 = int_to_ptr.hbm [resolvable:$true] %s26
      %s28 = sshll.u32 [#allocation3], 4
      %s29 = int_to_ptr.vmem [resolvable:$true] %s28
      %31 = dma.hbm_to_vmem [thread:$0]  %s27, 128, %s29, [#allocation4]
    $region5: #{output_attention.1} parent=1 // pred_fallthru
      _
    // Predicated region
    $region6: #{output_attention.1} parent=1 // pred_check
      _
    $region7: #{output_attention.1} parent=1 // pred_check_branch
      %33 = sbr.rel (0) target = $region9
    $region8: #{output_attention.1} parent=1 // pred_region
      %35 = vsyncadd [#allocation7], 0
      %s37 = sshll.u32 %s1, 4
      %s38 = int_to_ptr.hbm [resolvable:$true] %s37
      %s39 = sshll.u32 [#allocation6], 4
      %s40 = int_to_ptr.vmem [resolvable:$true] %s39
      %42 = dma.hbm_to_vmem [thread:$0]  %s38, 128, %s40, [#allocation7]
    $region9: #{output_attention.1} parent=1 // pred_fallthru
      _
    // Predicated region
    $region10: #{output_attention.1} parent=1 // pred_check
      _
    $region11: #{output_attention.1} parent=1 // pred_check_branch
      %44 = sbr.rel (0) target = $region13
    $region12: #{output_attention.1} parent=1 // pred_region
      %46 = vsyncadd [#allocation7], 0
      %s48 = sshll.u32 %s2, 4
      %s49 = int_to_ptr.hbm [resolvable:$true] %s48
      %s50 = sshll.u32 [#allocation8], 4
      %s51 = int_to_ptr.vmem [resolvable:$true] %s50
      %53 = dma.hbm_to_vmem [thread:$0]  %s49, 128, %s51, [#allocation7]
    $region13: #{output_attention.1} parent=1 // pred_fallthru
      _
    // Predicated region
    $region14: #{output_attention.1} parent=1 // pred_check
      _
    $region15: #{output_attention.1} parent=1 // pred_check_branch
      %55 = sbr.rel (0) target = $region17
    $region16: #{output_attention.1} parent=1 // pred_region
      %57 = vsyncadd [#allocation10], 0
      %s58 = sshll.u32 %s3, 4
      %s59 = int_to_ptr.hbm [resolvable:$true] %s58
      %s60 = sshll.u32 [#allocation9], 4
      %s61 = int_to_ptr.vmem [resolvable:$true] %s60
      %66 = dma.hbm_to_vmem [thread:$0]  %s59, 2048, %s61, [#allocation10], 128, 128, 8
    $region17: #{output_attention.1} parent=1 // pred_fallthru
      _
    // Predicated region
    $region18: #{output_attention.1} parent=1 // pred_check
      _
    $region19: #{output_attention.1} parent=1 // pred_check_branch
      %68 = sbr.rel (0) target = $region21
    $region20: #{output_attention.1} parent=1 // pred_region
      _
    $region21: #{output_attention.1} parent=1 // pred_fallthru
      _
    // Predicated region
    $region22: #{output_attention.1} parent=1 // pred_check
      _
    $region23: #{output_attention.1} parent=1 // pred_check_branch
      %70 = sbr.rel (0) target = $region25
    $region24: #{output_attention.1} parent=1 // pred_region
      %72 = vsyncadd [#allocation10], 0
      %s73 = sshll.u32 %s5, 4
      %s74 = int_to_ptr.hbm [resolvable:$true] %s73
      %s75 = sshll.u32 [#allocation11], 4
      %s76 = int_to_ptr.vmem [resolvable:$true] %s75
      %81 = dma.hbm_to_vmem [thread:$0]  %s74, 2048, %s76, [#allocation10], 128, 128, 8
    $region25: #{output_attention.1} parent=1 // pred_fallthru
      _
    // Predicated region
    $region26: #{output_attention.1} parent=1 // pred_check
      _
    $region27: #{output_attention.1} parent=1 // pred_check_branch
      %83 = sbr.rel (0) target = $region29
    $region28: #{output_attention.1} parent=1 // pred_region
      _
    $region29: #{output_attention.1} parent=1 // pred_fallthru
      _
    // Predicated region
    $region30: #{output_attention.1} parent=1 // pred_check
      _
    $region31: #{output_attention.1} parent=1 // pred_check_branch
      %85 = sbr.rel (0) target = $region33
    $region32: #{output_attention.1} parent=1 // pred_region
      _
    $region33: #{output_attention.1} parent=1 // pred_fallthru
      _
    // Predicated region
    $region34: #{output_attention.1} parent=1 // pred_check
      _
    $region35: #{output_attention.1} parent=1 // pred_check_branch
      %87 = sbr.rel (0) target = $region37
    $region36: #{output_attention.1} parent=1 // pred_region
      _
    $region37: #{output_attention.1} parent=1 // pred_fallthru
      _
    // Predicated region
    $region38: #{output_attention.1} parent=1 // pred_check
      _
    $region39: #{output_attention.1} parent=1 // pred_check_branch
      %89 = sbr.rel (0) target = $region41
    $region40: #{output_attention.1} parent=1 // pred_region
      %91 = dma.done [#allocation4], 128
    $region41: #{output_attention.1} parent=1 // pred_fallthru
      _
    // Predicated region
    $region42: #{output_attention.1} parent=1 // pred_check
      _
    $region43: #{output_attention.1} parent=1 // pred_check_branch
      %93 = sbr.rel (0) target = $region45
    $region44: #{output_attention.1} parent=1 // pred_region
      %95 = dma.done [#allocation7], 128
    $region45: #{output_attention.1} parent=1 // pred_fallthru
      _
    // Predicated region
    $region46: #{output_attention.1} parent=1 // pred_check
      _
    $region47: #{output_attention.1} parent=1 // pred_check_branch
      %97 = sbr.rel (0) target = $region49
    $region48: #{output_attention.1} parent=1 // pred_region
      %99 = dma.done [#allocation7], 128
    $region49: #{output_attention.1} parent=1 // pred_fallthru
      _
    // Predicated region
    $region50: #{output_attention.1} parent=1 // pred_check
      _
    $region51: #{output_attention.1} parent=1 // pred_check_branch
      %101 = sbr.rel (0) target = $region53
    $region52: #{output_attention.1} parent=1 // pred_region
      %103 = dma.done [#allocation10], 2048
    $region53: #{output_attention.1} parent=1 // pred_fallthru
      _
    // Predicated region
    $region54: #{output_attention.1} parent=1 // pred_check
      _
    $region55: #{output_attention.1} parent=1 // pred_check_branch
      %105 = sbr.rel (0) target = $region57
    $region56: #{output_attention.1} parent=1 // pred_region
      %107 = dma.done [#allocation10], 2048
    $region57: #{output_attention.1} parent=1 // pred_fallthru
      _
    %v108 = vld [vmem:[#allocation3] sm:$0xff]
    %v109 = vld [vmem:[#allocation6] sm:$0xff]
    %v110 = vld [vmem:[#allocation8] sm:$0xff]
    %v111 = vld [vmem:[#allocation9] sm:$0xff]
    %v112 = vld [vmem:[#allocation9 + $0x8] sm:$0xff]
    %v113 = vld [vmem:[#allocation9 + $0x10] sm:$0xff]
    %v114 = vld [vmem:[#allocation9 + $0x18] sm:$0xff]
    %v115 = vld [vmem:[#allocation9 + $0x20] sm:$0xff]
    %v116 = vld [vmem:[#allocation9 + $0x28] sm:$0xff]
    %v117 = vld [vmem:[#allocation9 + $0x30] sm:$0xff]
    %v118 = vld [vmem:[#allocation9 + $0x38] sm:$0xff]
    %v119 = vld [vmem:[#allocation9 + $0x40] sm:$0xff]
    %v120 = vld [vmem:[#allocation9 + $0x48] sm:$0xff]
    %v121 = vld [vmem:[#allocation9 + $0x50] sm:$0xff]
    %v122 = vld [vmem:[#allocation9 + $0x58] sm:$0xff]
    %v123 = vld [vmem:[#allocation9 + $0x60] sm:$0xff]
    %v124 = vld [vmem:[#allocation9 + $0x68] sm:$0xff]
    %v125 = vld [vmem:[#allocation9 + $0x70] sm:$0xff]
    %v126 = vld [vmem:[#allocation9 + $0x78] sm:$0xff]
    %v127 = vld [vmem:[#allocation11] sm:$0xff]
    %v128 = vld [vmem:[#allocation11 + $0x8] sm:$0xff]
    %v129 = vld [vmem:[#allocation11 + $0x10] sm:$0xff]
    %v130 = vld [vmem:[#allocation11 + $0x18] sm:$0xff]
    %v131 = vld [vmem:[#allocation11 + $0x20] sm:$0xff]
    %v132 = vld [vmem:[#allocation11 + $0x28] sm:$0xff]
    %v133 = vld [vmem:[#allocation11 + $0x30] sm:$0xff]
    %v134 = vld [vmem:[#allocation11 + $0x38] sm:$0xff]
    %v135 = vld [vmem:[#allocation11 + $0x40] sm:$0xff]
    %v136 = vld [vmem:[#allocation11 + $0x48] sm:$0xff]
    %v137 = vld [vmem:[#allocation11 + $0x50] sm:$0xff]
    %v138 = vld [vmem:[#allocation11 + $0x58] sm:$0xff]
    %v139 = vld [vmem:[#allocation11 + $0x60] sm:$0xff]
    %v140 = vld [vmem:[#allocation11 + $0x68] sm:$0xff]
    %v141 = vld [vmem:[#allocation11 + $0x70] sm:$0xff]
    %v142 = vld [vmem:[#allocation11 + $0x78] sm:$0xff]
    %v143 = vld [vmem:[%s4] sm:$0x1]
    %v144 = vld [vmem:[%s6] sm:$0x1]
    %v145 = vld [vmem:[%s7] sm:$0x1]
    %s146 = sld [smem:[#allocation2]]
    %v148 = vperm.slane %v144, 0
    %150 = vmatpush.msra.mxu0 %v142
    %151 = vmatpush.msra.mxu0 %v141
    %152 = vmatpush.msra.mxu0 %v140
    %153 = vmatpush.msra.mxu0 %v139
    %154 = vmatpush.msra.mxu0 %v138
    %155 = vmatpush.msra.mxu0 %v137
    %156 = vmatpush.msra.mxu0 %v136
    %157 = vmatpush.msra.mxu0 %v135
    %158 = vmatpush.msra.mxu0 %v134
    %159 = vmatpush.msra.mxu0 %v133
    %160 = vmatpush.msra.mxu0 %v132
    %161 = vmatpush.msra.mxu0 %v131
    %162 = vmatpush.msra.mxu0 %v130
    %163 = vmatpush.msra.mxu0 %v129
    %164 = vmatpush.msra.mxu0 %v128
    %165 = vmatpush.msra.mxu0 %v127
    %166 = vmatmul.f32.gmra.mxu0 %v108
    %v167 = vpop.f32.mrf.mxu0
    %v168 = vadd.f32 %v148, %v167
    %169 = vdwg.mxu0
    %v171 = vperm.slane %v143, 0
    %173 = vmatpush.msra.mxu0 %v126
    %174 = vmatpush.msra.mxu0 %v125
    %175 = vmatpush.msra.mxu0 %v124
    %176 = vmatpush.msra.mxu0 %v123
    %177 = vmatpush.msra.mxu0 %v122
    %178 = vmatpush.msra.mxu0 %v121
    %179 = vmatpush.msra.mxu0 %v120
    %180 = vmatpush.msra.mxu0 %v119
    %181 = vmatpush.msra.mxu0 %v118
    %182 = vmatpush.msra.mxu0 %v117
    %183 = vmatpush.msra.mxu0 %v116
    %184 = vmatpush.msra.mxu0 %v115
    %185 = vmatpush.msra.mxu0 %v114
    %186 = vmatpush.msra.mxu0 %v113
    %187 = vmatpush.msra.mxu0 %v112
    %188 = vmatpush.msra.mxu0 %v111
    %189 = vmatmul.f32.gmra.mxu0 %v109
    %v190 = vpop.f32.mrf.mxu0
    %v191 = vadd.f32 %v171, %v190
    %192 = vmatmul.f32.gmra.mxu0 %v110
    %v193 = vpop.f32.mrf.mxu0
    %v194 = vadd.f32 %v171, %v193
    %195 = vdwg.mxu0
    %v196 = vadd.f32 %v168, %v191
    %v197 = vadd.f32 %v168, %v194
    %v198 = vtanh.pop %v196
    %v199 = vtanh.pop %v197
    %v201 = vperm.slane %v145, 0
    %v203 = vmul.f32 %v198, %v201
    %v204 = vmul.f32 %v199, %v201
    %205 = vadd.xlane.f32.xlu0 %v203
    %v206 = vpop.xlane.xlu0 %205
    %207 = vadd.xlane.f32.xlu0 %v204
    %v208 = vpop.xlane.xlu0 %207
    %v209 = vstv %s146
    %v210 = vadd.f32 %v206, %v209
    %v211 = vadd.f32 %v208, %v209
    %v212 = vmax.f32 %v210, %v211
    %v213 = vsub.f32 %v210, %v212
    %v214 = vmul.f32 %v213, 1.442695
    %v215 = vpow.pop %v214
    %v216 = vsub.f32 %v211, %v212
    %v217 = vmul.f32 %v216, 1.442695
    %v218 = vpow.pop %v217
    %v219 = vadd.f32 %v215, %v218
    %v220 = vrcp.pop %v219
    %v221 = vmul.f32 %v219, %v220
    %v222 = vsub.f32 1.0, %v221
    %v223 = vmul.f32 %v220, %v222
    %v224 = vadd.f32 %v220, %v223
    %vm225 = vweird.f32 %v219
    %vm226 = vweird.f32 %v220
    %vm227 = vmor %vm225, %vm226
    %v228 = vsel %vm227, %v220, %v224
    %v229 = vand.u32 2147483647, %v219
    %vm230 = vcmp.eq.f32.partialorder %v229, 8.507059e+37
    %v231 = vand.u32 %v219, 2147483648
    %v232 = vor.u32 1.1754944e-38, %v231
    %v233 = vsel %vm230, %v232, %v228
    %v234 = vmul.f32 1.0, %v233
    %v235 = vmul.f32 %v215, %v234
    %v236 = vmul.f32 %v218, %v234
    %v237 = vmul.f32 %v235, %v109
    %v238 = vmul.f32 %v236, %v110
    %v239 = vadd.f32 %v237, %v238
    %240 = vst [vmem:[#allocation12] sm:$0xff] %v239
    %v241 = vlaneseq
    %v242 = vand.u32 %v241, 127
    %vm243 = vcmp.eq.s32.totalorder %v242, 0
    %vm244 = vcmp.eq.s32.totalorder %v242, 1
    %v245 = vsel %vm244, %v236, 0.0
    %v246 = vsel %vm243, %v235, %v245
    %247 = vst [vmem:[%s10] sm:$0xff] %v246
    // Predicated region
    $region58: #{output_attention.1} parent=1 // pred_check
      _
    $region59: #{output_attention.1} parent=1 // pred_check_branch
      %249 = sbr.rel (0) target = $region61
    $region60: #{output_attention.1} parent=1 // pred_region
      %251 = vsyncadd [#allocation5], 0
      %s253 = sshll.u32 [#allocation12], 4
      %s254 = int_to_ptr.vmem [resolvable:$true] %s253
      %s255 = sshll.u32 %s9, 4
      %s256 = int_to_ptr.hbm [resolvable:$true] %s255
      %258 = dma.vmem_to_hbm [thread:$0]  %s254, 128, %s256, [#allocation5]
    $region61: #{output_attention.1} parent=1 // pred_fallthru
      _
    // Predicated region
    $region62: #{output_attention.1} parent=1 // pred_check
      _
    $region63: #{output_attention.1} parent=1 // pred_check_branch
      %260 = sbr.rel (0) target = $region65
    $region64: #{output_attention.1} parent=1 // pred_region
      _
    $region65: #{output_attention.1} parent=1 // pred_fallthru
      _
    // Predicated region
    $region66: #{output_attention.1} parent=1 // pred_check
      _
    $region67: #{output_attention.1} parent=1 // pred_check_branch
      %262 = sbr.rel (0) target = $region69
    $region68: #{output_attention.1} parent=1 // pred_region
      %264 = dma.done [#allocation5], 128
    $region69: #{output_attention.1} parent=1 // pred_fallthru
      _
    // Predicated region
    $region70: #{output_attention.1} parent=1 // pred_check
      _
    $region71: #{output_attention.1} parent=1 // pred_check_branch
      %266 = sbr.rel (0) target = $region73
    $region72: #{output_attention.1} parent=1 // pred_region
      _
    $region73: #{output_attention.1} parent=1 // pred_fallthru
      _
    %267 = vsyncpa [#allocation4], 1
    %268 = vsyncpa [#allocation7], 1
    %269 = vsyncpa [#allocation10], 1
    %270 = vsyncpa [#allocation5], 1

</llo_original>
